<compile_context>
chip_gen: v7x
topology: tpu7x:2x2x1
jax: 0.10.0
libtpu: 0.0.40
codegen_flags: <defaults>
</compile_context>

<pallas_src>
import jax
import jax.numpy as jnp
from jax.experimental import pallas as pl

# ----------------------------- configuration --------------------------------
B, C, H, W = 2, 4, 16, 16        # images: [B, C, H, W]
P_SZ = 4                         # patch size
NP = (H // P_SZ) * (W // P_SZ)   # 16 patches per image
CPP = C * P_SZ * P_SZ            # 64 features per patch
D = 32                           # joint (text/image) hidden dim
T = 8                            # prompt tokens
VOCAB = 64                       # synthetic tokenizer vocab
H1, H2, H3 = 64, 32, 16          # reward-MLP hidden sizes (… -> 1)

# Reward normalization constants used by ImageReward.inference_rank
IR_MEAN = 0.16717362830052426
IR_STD = 1.0333394966054072

# Weight-slab row offsets (all multiples of 8 -> tile-aligned sublane views).
_R_WQT = 0                # (wq / sqrt(D))^T              rows [  0,  32)
_R_WPK = _R_WQT + D       # wp @ wk                       rows [ 32,  96)
_R_WPVO = _R_WPK + CPP    # wp @ (wv @ wo)                rows [ 96, 160)
_R_HEAD = _R_WPVO + CPP   # folded reward head (lane 0)   rows [160, 192)
_R_END = _R_HEAD + D


# ------------------------------- kernel -------------------------------------
def _reward_kernel(patches_ref, cls_ref, w_ref, b_ref, out_ref):
    patches = patches_ref[...]                                   # (B*NP, CPP) bf16

    # Fused patch-embed -> key / value@out-proj: two MXU pushes against
    # static sublane-aligned slab views (no lane slicing of a fused result).
    k_flat = jnp.dot(patches, w_ref[_R_WPK:_R_WPVO, :],
                     preferred_element_type=jnp.float32)         # (B*NP, D) f32
    vo_flat = jnp.dot(patches, w_ref[_R_WPVO:_R_HEAD, :],
                      preferred_element_type=jnp.float32)        # (B*NP, D) f32

    # Shared CLS query as a column: q^T = (wq / sqrt(D))^T @ cls^T.
    q_col = jnp.dot(w_ref[_R_WQT:_R_WPK, :], cls_ref[...],
                    preferred_element_type=jnp.float32)          # (D, 1) f32

    # Attention logits for every patch of every image in one flat 2-D matvec.
    s = jnp.dot(k_flat.astype(jnp.bfloat16), q_col.astype(jnp.bfloat16),
                preferred_element_type=jnp.float32)              # (B*NP, 1) f32

    # Per-image softmax in the flat layout.  Max-subtraction dropped: logits
    # are O(1) after the folded 1/sqrt(D) scale (tiny numerics delta).
    p = jnp.exp(s)                                               # (B*NP, 1) f32
    pw = p * vo_flat                                             # (B*NP, D) f32 (VPU)

    # Sublane-segment sums (statically unrolled over the tiny batch).
    wsum = jnp.concatenate(
        [jnp.sum(pw[b * NP:(b + 1) * NP, :], axis=0, keepdims=True)
         for b in range(B)], axis=0)                             # (B, D) f32
    denom = jnp.concatenate(
        [jnp.sum(p[b * NP:(b + 1) * NP, :], axis=0, keepdims=True)
         for b in range(B)], axis=0)                             # (B, 1) f32
    ctx = wsum * pl.reciprocal(denom, approx=True)               # (B, D) f32 (EUP)

    # Folded reward head: real weights live in lane 0, other lanes are zero.
    scores = jnp.dot(ctx.astype(jnp.bfloat16), w_ref[_R_HEAD:_R_END, :],
                     preferred_element_type=jnp.float32)         # (B, D): lane0 = score
    total = jnp.sum(scores, keepdims=True)                       # (1, 1) = sum_b score_b

    # Mean over images + folded bias / reward normalization; single unmasked
    # lane-dense (8,128) store (final scalar replicated to every element).
    row = b_ref[...] + total * (1.0 / B)                         # (1, 128) f32
    out_ref[...] = jnp.broadcast_to(row, out_ref.shape)          # (8, 128)


# -------------------- one-time offline weight folding ------------------------
def fold_params(params):
    """Fold the backbone/head weights into the two packed kernel operands.

    Pure linear algebra, executed ONCE (hoisted out of the per-call path).
    """
    wp, bp = params["wp"], params["bp"]
    wq, wk, wv, wo = params["wq"], params["wk"], params["wv"], params["wo"]

    wvo = wv @ wo                                    # fold value / out projections
    w_pk = wp @ wk                                   # patch-embed folded into K
    w_pvo = wp @ wvo                                 # patch-embed folded into V@O
    wq_t = (wq * (1.0 / (D ** 0.5))).T               # attention scale folded, transposed

    # Activation-free MLP head folded to a single (D,1) matvec + scalar bias.
    w_mlp = params["w1"] @ params["w2"] @ params["w3"] @ params["w4"]          # (D, 1)
    b_mlp = ((params["b1"] @ params["w2"] + params["b2"]) @ params["w3"]
             + params["b3"]) @ params["w4"] + params["b4"]                     # (1, 1)

    # Exact bias folds:
    #  * key-path patch-embed bias (bp@wk) adds the same constant to every
    #    softmax logit (shared CLS query) -> cancels, dropped.
    #  * value-path bias (bp@wvo) rides through the attention (rows sum to 1)
    #    and lands in the head bias together with b_mlp and the reward
    #    normalization (x - IR_MEAN) / IR_STD.
    b_vo = bp @ wvo                                                            # (1, D)
    w_head = w_mlp * (1.0 / IR_STD)                                            # (D, 1)
    b_head = (b_vo @ w_mlp + b_mlp - IR_MEAN) * (1.0 / IR_STD)                 # (1, 1)

    # Pack everything into one bf16 sublane-stacked slab (lane width D = 32:
    # no padded contraction dims, so v5e's 128-wide MXU still single-passes)
    # plus one f32 bias row.
    w_head_pad = jnp.pad(w_head, ((0, 0), (0, D - 1)))                         # (D, D)
    w_slab = jnp.concatenate([wq_t, w_pk, w_pvo, w_head_pad],
                             axis=0).astype(jnp.bfloat16)                      # (192, D)
    b_row = jnp.tile(b_head.astype(jnp.float32), (1, 128))                     # (1, 128)

    return dict(tok_emb=params["tok_emb"], w_slab=w_slab, b_row=b_row)


# ------------------------------- wrapper -------------------------------------
def image_reward_forward(images_nchw, token_ids, folded):
    """Returns a scalar float32 mean reward score (matches module forward)."""
    assert images_nchw.shape == (B, C, H, W)

    # patchify NCHW -> (B*NP, C*p*p); bf16 MXU operand (layout plumbing in JAX).
    patches = images_nchw.reshape(B, C, H // P_SZ, P_SZ, W // P_SZ, P_SZ)
    patches = patches.transpose(0, 2, 4, 1, 3, 5).reshape(B * NP, CPP)
    patches = patches.astype(jnp.bfloat16)

    # Only the prompt CLS token embedding is needed, as a (D, 1) column.
    cls_col = folded["tok_emb"][token_ids[0]].reshape(D, 1).astype(jnp.bfloat16)

    # Single grid-free invocation; 4 whole-array VMEM operands (KB-scale
    # footprint, far below scoped VMEM on v5e/v6e/v7x), 1 output DMA.
    out = pl.pallas_call(
        _reward_kernel,
        out_shape=jax.ShapeDtypeStruct((8, 128), jnp.float32),
    )(patches, cls_col, folded["w_slab"], folded["b_row"])
    return out[0, 0]


# --------------------------- deterministic params ----------------------------
def init_params(key):
    ks = jax.random.split(key, 15)

    def norm(k, shape, scale):
        return jax.random.normal(k, shape, jnp.float32) * scale

    # Nonzero biases so the bias-folding paths are actually exercised.
    return dict(
        tok_emb=norm(ks[0], (VOCAB, D), 0.02),
        wp=norm(ks[1], (CPP, D), CPP ** -0.5),
        bp=norm(ks[2], (1, D), 0.05),
        wq=norm(ks[3], (D, D), D ** -0.5),
        wk=norm(ks[4], (D, D), D ** -0.5),
        wv=norm(ks[5], (D, D), D ** -0.5),
        wo=norm(ks[6], (D, D), D ** -0.5),
        w1=norm(ks[7], (D, H1), D ** -0.5),
        b1=norm(ks[8], (1, H1), 0.05),
        w2=norm(ks[9], (H1, H2), H1 ** -0.5),
        b2=norm(ks[10], (1, H2), 0.05),
        w3=norm(ks[11], (H2, H3), H2 ** -0.5),
        b3=norm(ks[12], (1, H3), 0.05),
        w4=norm(ks[13], (H3, 1), H3 ** -0.5),
        b4=norm(ks[14], (1, 1), 0.05),
    )


if __name__ == "__main__":
    key = jax.random.PRNGKey(0)
    k_img, k_par = jax.random.split(key)

    images = jax.random.normal(k_img, (B, C, H, W), jnp.float32)   # "List[Image]" -> batched tensor
    prompt = "a photo of a cat"
    token_ids = jnp.array([ord(c) % VOCAB for c in prompt.ljust(T)[:T]],
                          dtype=jnp.int32)                         # deterministic "tokenizer"

    params = init_params(k_par)
    folded = fold_params(params)            # one-time fold, off the per-call path
    jax.block_until_ready(folded)

    score = image_reward_forward(images, token_ids, folded)
    jax.block_until_ready(score)
    print("KERNEL_OK")
</pallas_src>

<mosaic_0001>
module attributes {stable_mosaic.version = 11 : i64} {
  func.func @_reward_kernel(%arg0: memref<32x64xbf16, #tpu.memory_space<vmem>>, %arg1: memref<32x1xbf16, #tpu.memory_space<vmem>>, %arg2: memref<192x32xbf16, #tpu.memory_space<vmem>>, %arg3: memref<1x128xf32, #tpu.memory_space<vmem>>, %arg4: memref<8x128xf32, #tpu.memory_space<vmem>>) attributes {dimension_semantics = [], scalar_prefetch = 0 : i64, scratch_operands = 0 : i64, tpu.core_type = #tpu.core_type<tc>} {
    %c0 = arith.constant 0 : index
    %c0_0 = arith.constant 0 : index
    %0 = vector.load %arg0[%c0, %c0_0] : memref<32x64xbf16, #tpu.memory_space<vmem>>, vector<32x64xbf16>
    %c32 = arith.constant 32 : index
    %c0_1 = arith.constant 0 : index
    %1 = vector.load %arg2[%c32, %c0_1] : memref<192x32xbf16, #tpu.memory_space<vmem>>, vector<64x32xbf16>
    %cst = arith.constant dense<0.000000e+00> : vector<32x32xf32>
    %2 = tpu.matmul %0, %1, %cst {dimension_numbers = #tpu.dot_dimension_numbers<[1], [0], [0], [1], [0, 0, 1, 1], [], []>} : vector<32x64xbf16>, vector<64x32xbf16>, vector<32x32xf32> -> vector<32x32xf32>
    %c96 = arith.constant 96 : index
    %c0_2 = arith.constant 0 : index
    %3 = vector.load %arg2[%c96, %c0_2] : memref<192x32xbf16, #tpu.memory_space<vmem>>, vector<64x32xbf16>
    %cst_3 = arith.constant dense<0.000000e+00> : vector<32x32xf32>
    %4 = tpu.matmul %0, %3, %cst_3 {dimension_numbers = #tpu.dot_dimension_numbers<[1], [0], [0], [1], [0, 0, 1, 1], [], []>} : vector<32x64xbf16>, vector<64x32xbf16>, vector<32x32xf32> -> vector<32x32xf32>
    %c0_4 = arith.constant 0 : index
    %c0_5 = arith.constant 0 : index
    %5 = vector.load %arg2[%c0_4, %c0_5] : memref<192x32xbf16, #tpu.memory_space<vmem>>, vector<32x32xbf16>
    %c0_6 = arith.constant 0 : index
    %c0_7 = arith.constant 0 : index
    %6 = vector.load %arg1[%c0_6, %c0_7] : memref<32x1xbf16, #tpu.memory_space<vmem>>, vector<32x1xbf16>
    %cst_8 = arith.constant dense<0.000000e+00> : vector<32x1xf32>
    %7 = tpu.matmul %5, %6, %cst_8 {dimension_numbers = #tpu.dot_dimension_numbers<[1], [0], [0], [1], [0, 0, 1, 1], [], []>} : vector<32x32xbf16>, vector<32x1xbf16>, vector<32x1xf32> -> vector<32x1xf32>
    %8 = arith.truncf %2 : vector<32x32xf32> to vector<32x32xbf16>
    %9 = arith.truncf %7 : vector<32x1xf32> to vector<32x1xbf16>
    %cst_9 = arith.constant dense<0.000000e+00> : vector<32x1xf32>
    %10 = tpu.matmul %8, %9, %cst_9 {dimension_numbers = #tpu.dot_dimension_numbers<[1], [0], [0], [1], [0, 0, 1, 1], [], []>} : vector<32x32xbf16>, vector<32x1xbf16>, vector<32x1xf32> -> vector<32x1xf32>
    %11 = math.exp %10 : vector<32x1xf32>
    %12 = vector.broadcast %11 : vector<32x1xf32> to vector<32x32xf32>
    %13 = arith.mulf %12, %4 : vector<32x32xf32>
    %14 = vector.extract_strided_slice %13 {offsets = [0, 0], sizes = [16, 32], strides = [1, 1]} : vector<32x32xf32> to vector<16x32xf32>
    %cst_10 = arith.constant dense<0.000000e+00> : vector<32xf32>
    %15 = vector.multi_reduction <add>, %14, %cst_10 [0] : vector<16x32xf32> to vector<32xf32>
    %16 = vector.shape_cast %15 : vector<32xf32> to vector<1x32xf32>
    %17 = vector.extract_strided_slice %13 {offsets = [16, 0], sizes = [16, 32], strides = [1, 1]} : vector<32x32xf32> to vector<16x32xf32>
    %cst_11 = arith.constant dense<0.000000e+00> : vector<32xf32>
    %18 = vector.multi_reduction <add>, %17, %cst_11 [0] : vector<16x32xf32> to vector<32xf32>
    %19 = vector.shape_cast %18 : vector<32xf32> to vector<1x32xf32>
    %20 = tpu.concatenate %16, %19 in 0 : vector<1x32xf32>, vector<1x32xf32> -> vector<2x32xf32>
    %21 = vector.extract_strided_slice %11 {offsets = [0, 0], sizes = [16, 1], strides = [1, 1]} : vector<32x1xf32> to vector<16x1xf32>
    %cst_12 = arith.constant dense<0.000000e+00> : vector<1xf32>
    %22 = vector.multi_reduction <add>, %21, %cst_12 [0] : vector<16x1xf32> to vector<1xf32>
    %23 = vector.shape_cast %22 : vector<1xf32> to vector<1x1xf32>
    %24 = vector.extract_strided_slice %11 {offsets = [16, 0], sizes = [16, 1], strides = [1, 1]} : vector<32x1xf32> to vector<16x1xf32>
    %cst_13 = arith.constant dense<0.000000e+00> : vector<1xf32>
    %25 = vector.multi_reduction <add>, %24, %cst_13 [0] : vector<16x1xf32> to vector<1xf32>
    %26 = vector.shape_cast %25 : vector<1xf32> to vector<1x1xf32>
    %27 = tpu.concatenate %23, %26 in 0 : vector<1x1xf32>, vector<1x1xf32> -> vector<2x1xf32>
    %28 = tpu.reciprocal %27 {approx = true} : vector<2x1xf32> -> vector<2x1xf32>
    %29 = vector.broadcast %28 : vector<2x1xf32> to vector<2x32xf32>
    %30 = arith.mulf %20, %29 : vector<2x32xf32>
    %31 = arith.truncf %30 : vector<2x32xf32> to vector<2x32xbf16>
    %c160 = arith.constant 160 : index
    %c0_14 = arith.constant 0 : index
    %32 = vector.load %arg2[%c160, %c0_14] : memref<192x32xbf16, #tpu.memory_space<vmem>>, vector<32x32xbf16>
    %cst_15 = arith.constant dense<0.000000e+00> : vector<2x32xf32>
    %33 = tpu.matmul %31, %32, %cst_15 {dimension_numbers = #tpu.dot_dimension_numbers<[1], [0], [0], [1], [0, 0, 1, 1], [], []>} : vector<2x32xbf16>, vector<32x32xbf16>, vector<2x32xf32> -> vector<2x32xf32>
    %34 = vector.shape_cast %33 : vector<2x32xf32> to vector<1x2x32xf32>
    %cst_16 = arith.constant dense<0.000000e+00> : vector<1xf32>
    %35 = vector.multi_reduction <add>, %34, %cst_16 [1, 2] : vector<1x2x32xf32> to vector<1xf32>
    %36 = vector.shape_cast %35 : vector<1xf32> to vector<1x1x1xf32>
    %37 = vector.extract %36[0, 0, 0] : f32 from vector<1x1x1xf32>
    %38 = vector.broadcast %37 : f32 to vector<1x1xf32>
    %c0_17 = arith.constant 0 : index
    %c0_18 = arith.constant 0 : index
    %39 = vector.load %arg3[%c0_17, %c0_18] : memref<1x128xf32, #tpu.memory_space<vmem>>, vector<1x128xf32>
    %cst_19 = arith.constant 5.000000e-01 : f32
    %40 = vector.broadcast %cst_19 : f32 to vector<1x1xf32>
    %41 = arith.mulf %38, %40 : vector<1x1xf32>
    %42 = vector.broadcast %41 : vector<1x1xf32> to vector<1x128xf32>
    %43 = arith.addf %39, %42 : vector<1x128xf32>
    %44 = vector.shape_cast %43 : vector<1x128xf32> to vector<1x128xf32>
    %45 = vector.broadcast %44 : vector<1x128xf32> to vector<8x128xf32>
    %c0_20 = arith.constant 0 : index
    %c0_21 = arith.constant 0 : index
    %46 = vector.load %arg4[%c0_20, %c0_21] : memref<8x128xf32, #tpu.memory_space<vmem>>, vector<8x128xf32>
    tpu.vector_store %arg4[%c0_20, %c0_21], %45 {strides = array<i32>} : memref<8x128xf32, #tpu.memory_space<vmem>>, vector<8x128xf32>,
    return
  }
}

</mosaic_0001>

<llo_original>
// kernel: tpu_custom_call.1
$region0: #{tpu_custom_call.1}
  #allocation0 [shape = 'u32[]', space=smem, size = 0x4, offset = 0x4, fixed_abs, tag = 'smem constant byte address 0x4 - core index']
  #allocation1 [shape = 'u32[144,128]{1,0:T(1,128)}', space=vmem, size = 0x12000, scoped, tag = 'internal scratch']
  %s0 = inlined_call_operand.vmem [shape: bf16[32,64], index: 0, kind: input, shape index: {}]
  %s1 = inlined_call_operand.vmem [shape: bf16[32,1], index: 1, kind: input, shape index: {}]
  %s2 = inlined_call_operand.vmem [shape: bf16[192,32], index: 2, kind: input, shape index: {}]
  %s3 = inlined_call_operand.vmem [shape: f32[1,128], index: 3, kind: input, shape index: {}]
  %s4 = inlined_call_operand.hbm [shape: f32[8,128], index: 4, kind: output, shape index: {}]
  %s5 = sld [smem:[#allocation0]]
  $region26: #{tpu_custom_call.1} parent=0
    _
  %s7 = ssub.s32 1, %s5
  %s8 = scalar_select 0, %s7, %s5
  $region1: #{tpu_custom_call.1} parent=0
    #allocation2 [shape = 'u8[4096]{0}', space=vmem, size = 0x1000, scoped, tag = 'output window, operand 0, single buffered']
    #allocation3 [shape = 's32[1]{0}', space=sflag, size = 0x4, scoped, tag = 'scoped memory for tpu_custom_call.1']
    %9 = vsyncpa [#allocation3], 0
    // Predicated region
    $region2: #{tpu_custom_call.1} parent=1 // pred_check
      _
    $region3: #{tpu_custom_call.1} parent=1 // pred_check_branch
      %11 = sbr.rel (0) target = $region5
    $region4: #{tpu_custom_call.1} parent=1 // pred_region
      _
    $region5: #{tpu_custom_call.1} parent=1 // pred_fallthru
      _
    // Predicated region
    $region6: #{tpu_custom_call.1} parent=1 // pred_check
      _
    $region7: #{tpu_custom_call.1} parent=1 // pred_check_branch
      %13 = sbr.rel (0) target = $region9
    $region8: #{tpu_custom_call.1} parent=1 // pred_region
      _
    $region9: #{tpu_custom_call.1} parent=1 // pred_fallthru
      _
    // Predicated region
    $region10: #{tpu_custom_call.1} parent=1 // pred_check
      _
    $region11: #{tpu_custom_call.1} parent=1 // pred_check_branch
      %15 = sbr.rel (0) target = $region13
    $region12: #{tpu_custom_call.1} parent=1 // pred_region
      _
    $region13: #{tpu_custom_call.1} parent=1 // pred_fallthru
      _
    // Predicated region
    $region14: #{tpu_custom_call.1} parent=1 // pred_check
      _
    $region15: #{tpu_custom_call.1} parent=1 // pred_check_branch
      %17 = sbr.rel (0) target = $region17
    $region16: #{tpu_custom_call.1} parent=1 // pred_region
      _
    $region17: #{tpu_custom_call.1} parent=1 // pred_fallthru
      _
    %v19 = vld [vmem:[%s0] sm:$0xf]
    %v20 = vld [vmem:[%s0 + $0x4] sm:$0xf]
    %v21 = vld [vmem:[%s0 + $0x8] sm:$0xf]
    %v22 = vld [vmem:[%s0 + $0xc] sm:$0xf]
    %v23 = vld [vmem:[%s2 + $0x10] sm:$0xf]
    %v24 = vld [vmem:[%s2 + $0x14] sm:$0xf]
    %v25 = vld [vmem:[%s2 + $0x18] sm:$0xf]
    %v26 = vld [vmem:[%s2 + $0x1c] sm:$0xf]
    %v27 = vld [vmem:[%s2 + $0x20] sm:$0xf]
    %v28 = vld [vmem:[%s2 + $0x24] sm:$0xf]
    %v29 = vld [vmem:[%s2 + $0x28] sm:$0xf]
    %v30 = vld [vmem:[%s2 + $0x2c] sm:$0xf]
    %v35 = vunpack.c.l.b16 %v19
    %v36 = vunpack.c.l.b16 %v20
    %v37 = vunpack.c.l.b16 %v21
    %v38 = vunpack.c.l.b16 %v22
    %v39 = vpack.c.b16 %v36, %v35
    %v40 = vpack.c.b16 %v38, %v37
    %v49 = vunpack.c.l.b16 %v23
    %v50 = vunpack.c.l.b16 %v24
    %v51 = vunpack.c.l.b16 %v25
    %v52 = vunpack.c.l.b16 %v26
    %v53 = vunpack.c.l.b16 %v27
    %v54 = vunpack.c.l.b16 %v28
    %v55 = vunpack.c.l.b16 %v29
    %v56 = vunpack.c.l.b16 %v30
    %v57 = vpack.c.b16 %v50, %v49
    %v58 = vpack.c.b16 %v52, %v51
    %v59 = vpack.c.b16 %v54, %v53
    %v60 = vpack.c.b16 %v56, %v55
    %vm65 = vcmask 523264
    %v67 = vsel %vm65, %v39, 0
    %v70 = vsel %vm65, %v40, 0
    %72 = vmatprep.subr.bf16.mxu0 0
    %73 = vmatpush1.bf16.msra.mxu0 %v57
    %74 = vmatprep.subr.bf16.mxu0 0
    %75 = vmatpush1.bf16.msra.mxu0 %v58
    %76 = vmatprep.subr.bf16.mxu0 0
    %77 = vmatpush1.bf16.msra.mxu0 %v59
    %78 = vmatprep.subr.bf16.mxu0 0
    %79 = vmatpush1.bf16.msra.mxu0 %v60
    %80 = vmatprep.subr.bf16.mxu0 0
    %81 = vmatpush1.bf16.msra.mxu0 0
    %82 = vmatprep.subr.bf16.mxu0 0
    %83 = vmatpush1.bf16.msra.mxu0 0
    %84 = vmatprep.subr.bf16.mxu0 0
    %85 = vmatpush1.bf16.msra.mxu0 0
    %86 = vmatprep.subr.bf16.mxu0 0
    %87 = vmatpush1.bf16.msra.mxu0 0
    %88 = vmatprep.subr.bf16.mxu0 0
    %89 = vmatpush1.bf16.msra.mxu0 0
    %90 = vmatprep.subr.bf16.mxu0 0
    %91 = vmatpush1.bf16.msra.mxu0 0
    %92 = vmatprep.subr.bf16.mxu0 0
    %93 = vmatpush1.bf16.msra.mxu0 0
    %94 = vmatprep.subr.bf16.mxu0 0
    %95 = vmatpush1.bf16.msra.mxu0 0
    %96 = vmatprep.subr.bf16.mxu0 0
    %97 = vmatpush1.bf16.msra.mxu0 0
    %98 = vmatprep.subr.bf16.mxu0 0
    %99 = vmatpush1.bf16.msra.mxu0 0
    %100 = vmatprep.subr.bf16.mxu0 0
    %101 = vmatpush1.bf16.msra.mxu0 0
    %102 = vmatprep.subr.bf16.mxu0 0
    %103 = vmatpush1.bf16.msra.mxu0 0
    %104 = vmatprep.mubr.bf16.mxu0 0
    %105 = vmatmul.mubr.bf16.gmra.mrb[0].mxu0 %v67
    %v106 = vpop.f32.mrb[0].mxu0
    %v107 = vadd.f32 0.0, %v106
    %v108 = vpop.f32.mrb[0].mxu0
    %v109 = vpop.f32.mrb[0].mxu0
    %v110 = vadd.f32 0.0, %v109
    %v111 = vpop.f32.mrb[0].mxu0
    %112 = vmatprep.mubr.bf16.mxu0 0
    %113 = vmatmul.mubr.bf16.gmra.mrb[0].mxu0 %v70
    %v114 = vpop.f32.mrb[0].mxu0
    %v115 = vadd.f32 0.0, %v114
    %v116 = vpop.f32.mrb[0].mxu0
    %v117 = vpop.f32.mrb[0].mxu0
    %v118 = vadd.f32 0.0, %v117
    %v119 = vpop.f32.mrb[0].mxu0
    %120 = vdwg.mxu0
    %v121 = vld [vmem:[%s2 + $0x30] sm:$0xf]
    %v122 = vld [vmem:[%s2 + $0x34] sm:$0xf]
    %v123 = vld [vmem:[%s2 + $0x38] sm:$0xf]
    %v124 = vld [vmem:[%s2 + $0x3c] sm:$0xf]
    %v125 = vld [vmem:[%s2 + $0x40] sm:$0xf]
    %v126 = vld [vmem:[%s2 + $0x44] sm:$0xf]
    %v127 = vld [vmem:[%s2 + $0x48] sm:$0xf]
    %v128 = vld [vmem:[%s2 + $0x4c] sm:$0xf]
    %v137 = vunpack.c.l.b16 %v121
    %v138 = vunpack.c.l.b16 %v122
    %v139 = vunpack.c.l.b16 %v123
    %v140 = vunpack.c.l.b16 %v124
    %v141 = vunpack.c.l.b16 %v125
    %v142 = vunpack.c.l.b16 %v126
    %v143 = vunpack.c.l.b16 %v127
    %v144 = vunpack.c.l.b16 %v128
    %v145 = vpack.c.b16 %v138, %v137
    %v146 = vpack.c.b16 %v140, %v139
    %v147 = vpack.c.b16 %v142, %v141
    %v148 = vpack.c.b16 %v144, %v143
    %153 = vmatprep.subr.bf16.mxu0 0
    %154 = vmatpush1.bf16.msra.mxu0 %v145
    %155 = vmatprep.subr.bf16.mxu0 0
    %156 = vmatpush1.bf16.msra.mxu0 %v146
    %157 = vmatprep.subr.bf16.mxu0 0
    %158 = vmatpush1.bf16.msra.mxu0 %v147
    %159 = vmatprep.subr.bf16.mxu0 0
    %160 = vmatpush1.bf16.msra.mxu0 %v148
    %161 = vmatprep.subr.bf16.mxu0 0
    %162 = vmatpush1.bf16.msra.mxu0 0
    %163 = vmatprep.subr.bf16.mxu0 0
    %164 = vmatpush1.bf16.msra.mxu0 0
    %165 = vmatprep.subr.bf16.mxu0 0
    %166 = vmatpush1.bf16.msra.mxu0 0
    %167 = vmatprep.subr.bf16.mxu0 0
    %168 = vmatpush1.bf16.msra.mxu0 0
    %169 = vmatprep.subr.bf16.mxu0 0
    %170 = vmatpush1.bf16.msra.mxu0 0
    %171 = vmatprep.subr.bf16.mxu0 0
    %172 = vmatpush1.bf16.msra.mxu0 0
    %173 = vmatprep.subr.bf16.mxu0 0
    %174 = vmatpush1.bf16.msra.mxu0 0
    %175 = vmatprep.subr.bf16.mxu0 0
    %176 = vmatpush1.bf16.msra.mxu0 0
    %177 = vmatprep.subr.bf16.mxu0 0
    %178 = vmatpush1.bf16.msra.mxu0 0
    %179 = vmatprep.subr.bf16.mxu0 0
    %180 = vmatpush1.bf16.msra.mxu0 0
    %181 = vmatprep.subr.bf16.mxu0 0
    %182 = vmatpush1.bf16.msra.mxu0 0
    %183 = vmatprep.subr.bf16.mxu0 0
    %184 = vmatpush1.bf16.msra.mxu0 0
    %185 = vmatprep.mubr.bf16.mxu0 0
    %186 = vmatmul.mubr.bf16.gmra.mrb[0].mxu0 %v67
    %v187 = vpop.f32.mrb[0].mxu0
    %v188 = vadd.f32 0.0, %v187
    %v189 = vpop.f32.mrb[0].mxu0
    %v190 = vpop.f32.mrb[0].mxu0
    %v191 = vadd.f32 0.0, %v190
    %v192 = vpop.f32.mrb[0].mxu0
    %193 = vmatprep.mubr.bf16.mxu0 0
    %194 = vmatmul.mubr.bf16.gmra.mrb[0].mxu0 %v70
    %v195 = vpop.f32.mrb[0].mxu0
    %v196 = vadd.f32 0.0, %v195
    %v197 = vpop.f32.mrb[0].mxu0
    %v198 = vpop.f32.mrb[0].mxu0
    %v199 = vadd.f32 0.0, %v198
    %v200 = vpop.f32.mrb[0].mxu0
    %201 = vdwg.mxu0
    %v202 = vld [vmem:[%s2] sm:$0xf]
    %v203 = vld [vmem:[%s2 + $0x4] sm:$0xf]
    %v204 = vld [vmem:[%s2 + $0x8] sm:$0xf]
    %v205 = vld [vmem:[%s2 + $0xc] sm:$0xf]
    %v206 = vld [vmem:[%s1] sm:$0xf]
    %v207 = vld [vmem:[%s1 + $0x4] sm:$0xf]
    %v208 = vld [vmem:[%s1 + $0x8] sm:$0xf]
    %v209 = vld [vmem:[%s1 + $0xc] sm:$0xf]
    %v214 = vunpack.c.l.b16 %v202
    %v215 = vunpack.c.l.b16 %v203
    %v216 = vunpack.c.l.b16 %v204
    %v217 = vunpack.c.l.b16 %v205
    %v218 = vpack.c.b16 %v215, %v214
    %v219 = vpack.c.b16 %v217, %v216
    %v224 = vunpack.c.l.b16 %v206
    %v225 = vunpack.c.l.b16 %v207
    %v226 = vunpack.c.l.b16 %v208
    %v227 = vunpack.c.l.b16 %v209
    %v228 = vpack.c.b16 %v225, %v224
    %v229 = vpack.c.b16 %v227, %v226
    %vm232 = vcmask 261120
    %v234 = vsel %vm232, %v218, 0
    %v237 = vsel %vm232, %v219, 0
    %239 = vmatprep.subr.bf16.mxu0 0
    %240 = vmatpush1.bf16.msra.mxu0 %v228
    %241 = vmatprep.subr.bf16.mxu0 0
    %242 = vmatpush1.bf16.msra.mxu0 %v229
    %243 = vmatprep.subr.bf16.mxu0 0
    %244 = vmatpush1.bf16.msra.mxu0 0
    %245 = vmatprep.subr.bf16.mxu0 0
    %246 = vmatpush1.bf16.msra.mxu0 0
    %247 = vmatprep.subr.bf16.mxu0 0
    %248 = vmatpush1.bf16.msra.mxu0 0
    %249 = vmatprep.subr.bf16.mxu0 0
    %250 = vmatpush1.bf16.msra.mxu0 0
    %251 = vmatprep.subr.bf16.mxu0 0
    %252 = vmatpush1.bf16.msra.mxu0 0
    %253 = vmatprep.subr.bf16.mxu0 0
    %254 = vmatpush1.bf16.msra.mxu0 0
    %255 = vmatprep.subr.bf16.mxu0 0
    %256 = vmatpush1.bf16.msra.mxu0 0
    %257 = vmatprep.subr.bf16.mxu0 0
    %258 = vmatpush1.bf16.msra.mxu0 0
    %259 = vmatprep.subr.bf16.mxu0 0
    %260 = vmatpush1.bf16.msra.mxu0 0
    %261 = vmatprep.subr.bf16.mxu0 0
    %262 = vmatpush1.bf16.msra.mxu0 0
    %263 = vmatprep.subr.bf16.mxu0 0
    %264 = vmatpush1.bf16.msra.mxu0 0
    %265 = vmatprep.subr.bf16.mxu0 0
    %266 = vmatpush1.bf16.msra.mxu0 0
    %267 = vmatprep.subr.bf16.mxu0 0
    %268 = vmatpush1.bf16.msra.mxu0 0
    %269 = vmatprep.subr.bf16.mxu0 0
    %270 = vmatpush1.bf16.msra.mxu0 0
    %271 = vmatprep.mubr.bf16.mxu0 0
    %272 = vmatmul.mubr.bf16.gmra.mrb[0].mxu0 %v234
    %v273 = vpop.f32.mrb[0].mxu0
    %v274 = vadd.f32 0.0, %v273
    %v275 = vpop.f32.mrb[0].mxu0
    %v276 = vpop.f32.mrb[0].mxu0
    %v277 = vadd.f32 0.0, %v276
    %v278 = vpop.f32.mrb[0].mxu0
    %279 = vmatprep.mubr.bf16.mxu0 0
    %280 = vmatmul.mubr.bf16.gmra.mrb[0].mxu0 %v237
    %v281 = vpop.f32.mrb[0].mxu0
    %v282 = vadd.f32 0.0, %v281
    %v283 = vpop.f32.mrb[0].mxu0
    %v284 = vpop.f32.mrb[0].mxu0
    %v285 = vadd.f32 0.0, %v284
    %v286 = vpop.f32.mrb[0].mxu0
    %287 = vdwg.mxu0
    %v288 = vpack.c.bf16 %v110, %v107
    %v289 = vpack.c.bf16 %v118, %v115
    %v290 = vpack.c.bf16 %v277, %v274
    %v291 = vpack.c.bf16 %v285, %v282
    %v293 = vsel %vm232, %v288, 0
    %v296 = vsel %vm232, %v289, 0
    %298 = vmatprep.subr.bf16.mxu0 0
    %299 = vmatpush1.bf16.msra.mxu0 %v290
    %300 = vmatprep.subr.bf16.mxu0 0
    %301 = vmatpush1.bf16.msra.mxu0 %v291
    %302 = vmatprep.subr.bf16.mxu0 0
    %303 = vmatpush1.bf16.msra.mxu0 0
    %304 = vmatprep.subr.bf16.mxu0 0
    %305 = vmatpush1.bf16.msra.mxu0 0
    %306 = vmatprep.subr.bf16.mxu0 0
    %307 = vmatpush1.bf16.msra.mxu0 0
    %308 = vmatprep.subr.bf16.mxu0 0
    %309 = vmatpush1.bf16.msra.mxu0 0
    %310 = vmatprep.subr.bf16.mxu0 0
    %311 = vmatpush1.bf16.msra.mxu0 0
    %312 = vmatprep.subr.bf16.mxu0 0
    %313 = vmatpush1.bf16.msra.mxu0 0
    %314 = vmatprep.subr.bf16.mxu0 0
    %315 = vmatpush1.bf16.msra.mxu0 0
    %316 = vmatprep.subr.bf16.mxu0 0
    %317 = vmatpush1.bf16.msra.mxu0 0
    %318 = vmatprep.subr.bf16.mxu0 0
    %319 = vmatpush1.bf16.msra.mxu0 0
    %320 = vmatprep.subr.bf16.mxu0 0
    %321 = vmatpush1.bf16.msra.mxu0 0
    %322 = vmatprep.subr.bf16.mxu0 0
    %323 = vmatpush1.bf16.msra.mxu0 0
    %324 = vmatprep.subr.bf16.mxu0 0
    %325 = vmatpush1.bf16.msra.mxu0 0
    %326 = vmatprep.subr.bf16.mxu0 0
    %327 = vmatpush1.bf16.msra.mxu0 0
    %328 = vmatprep.subr.bf16.mxu0 0
    %329 = vmatpush1.bf16.msra.mxu0 0
    %330 = vmatprep.mubr.bf16.mxu0 0
    %331 = vmatmul.mubr.bf16.gmra.mrb[0].mxu0 %v293
    %v332 = vpop.f32.mrb[0].mxu0
    %v333 = vadd.f32 0.0, %v332
    %v334 = vpop.f32.mrb[0].mxu0
    %v335 = vpop.f32.mrb[0].mxu0
    %v336 = vadd.f32 0.0, %v335
    %v337 = vpop.f32.mrb[0].mxu0
    %338 = vmatprep.mubr.bf16.mxu0 0
    %339 = vmatmul.mubr.bf16.gmra.mrb[0].mxu0 %v296
    %v340 = vpop.f32.mrb[0].mxu0
    %v341 = vadd.f32 0.0, %v340
    %v342 = vpop.f32.mrb[0].mxu0
    %v343 = vpop.f32.mrb[0].mxu0
    %v344 = vadd.f32 0.0, %v343
    %v345 = vpop.f32.mrb[0].mxu0
    %346 = vdwg.mxu0
    %v347 = vmul.f32 %v333, 1.442695
    %v348 = vpow.pop %v347
    %v349 = vmul.f32 %v336, 1.442695
    %v350 = vpow.pop %v349
    %v351 = vmul.f32 %v341, 1.442695
    %v352 = vpow.pop %v351
    %v353 = vmul.f32 %v344, 1.442695
    %v354 = vpow.pop %v353
    %356 = vset.pattern.permute.xlu0 0
    %357 = vperm.xlu0 %356, %v348
    %v358 = vpop.permute.xlu0 %357
    %361 = vset.pattern.permute.xlu0 0
    %362 = vperm.xlu0 %361, %v350
    %v363 = vpop.permute.xlu0 %362
    %366 = vset.pattern.permute.xlu0 0
    %367 = vperm.xlu0 %366, %v352
    %v368 = vpop.permute.xlu0 %367
    %371 = vset.pattern.permute.xlu0 0
    %372 = vperm.xlu0 %371, %v354
    %v373 = vpop.permute.xlu0 %372
    %v375 = vmul.f32 %v358, %v188
    %v376 = vmul.f32 %v363, %v191
    %v377 = vmul.f32 %v368, %v196
    %v378 = vmul.f32 %v373, %v199
    %v379 = vsel %vm232, %v375, 0.0
    %v380 = vsel %vm232, %v376, 0.0
    %v381 = vadd.f32 %v379, %v380
    %v382 = vrot.slane %v381, 4
    %v383 = vadd.f32 %v381, %v382
    %v384 = vrot.slane %v383, 2
    %v385 = vadd.f32 %v383, %v384
    %v386 = vrot.slane %v385, 1
    %v387 = vadd.f32 %v385, %v386
    %v388 = vsel %vm232, %v377, 0.0
    %v389 = vsel %vm232, %v378, 0.0
    %v390 = vadd.f32 %v388, %v389
    %v391 = vrot.slane %v390, 4
    %v392 = vadd.f32 %v390, %v391
    %v393 = vrot.slane %v392, 2
    %v394 = vadd.f32 %v392, %v393
    %v395 = vrot.slane %v394, 1
    %v396 = vadd.f32 %v394, %v395
    %vm397 = vcmask 1040384
    %v398 = vsel %vm397, %v387, %v396
    %vm399 = vcmask 7168
    %v400 = vsel %vm399, %v348, 0.0
    %v401 = vsel %vm399, %v350, 0.0
    %v402 = vadd.f32 %v400, %v401
    %v403 = vrot.slane %v402, 4
    %v404 = vadd.f32 %v402, %v403
    %v405 = vrot.slane %v404, 2
    %v406 = vadd.f32 %v404, %v405
    %v407 = vrot.slane %v406, 1
    %v408 = vadd.f32 %v406, %v407
    %v409 = vsel %vm399, %v352, 0.0
    %v410 = vsel %vm399, %v354, 0.0
    %v411 = vadd.f32 %v409, %v410
    %v412 = vrot.slane %v411, 4
    %v413 = vadd.f32 %v411, %v412
    %v414 = vrot.slane %v413, 2
    %v415 = vadd.f32 %v413, %v414
    %v416 = vrot.slane %v415, 1
    %v417 = vadd.f32 %v415, %v416
    %v418 = vsel %vm397, %v408, %v417
    %v419 = vrcp.pop %v418
    %421 = vset.pattern.permute.xlu0 0
    %422 = vperm.xlu0 %421, %v419
    %v423 = vpop.permute.xlu0 %422
    %v425 = vmul.f32 %v398, %v423
    %v426 = vpack.c.bf16 %v425, %v425
    %v427 = vld [vmem:[%s2 + $0x50] sm:$0xf]
    %v428 = vld [vmem:[%s2 + $0x54] sm:$0xf]
    %v429 = vld [vmem:[%s2 + $0x58] sm:$0xf]
    %v430 = vld [vmem:[%s2 + $0x5c] sm:$0xf]
    %v435 = vunpack.c.l.b16 %v427
    %v436 = vunpack.c.l.b16 %v428
    %v437 = vunpack.c.l.b16 %v429
    %v438 = vunpack.c.l.b16 %v430
    %v439 = vpack.c.b16 %v436, %v435
    %v440 = vpack.c.b16 %v438, %v437
    %v444 = vsel %vm232, %v426, 0
    %446 = vmatprep.subr.bf16.mxu0 0
    %447 = vmatpush1.bf16.msra.mxu0 %v439
    %448 = vmatprep.subr.bf16.mxu0 0
    %449 = vmatpush1.bf16.msra.mxu0 %v440
    %450 = vmatprep.subr.bf16.mxu0 0
    %451 = vmatpush1.bf16.msra.mxu0 0
    %452 = vmatprep.subr.bf16.mxu0 0
    %453 = vmatpush1.bf16.msra.mxu0 0
    %454 = vmatprep.subr.bf16.mxu0 0
    %455 = vmatpush1.bf16.msra.mxu0 0
    %456 = vmatprep.subr.bf16.mxu0 0
    %457 = vmatpush1.bf16.msra.mxu0 0
    %458 = vmatprep.subr.bf16.mxu0 0
    %459 = vmatpush1.bf16.msra.mxu0 0
    %460 = vmatprep.subr.bf16.mxu0 0
    %461 = vmatpush1.bf16.msra.mxu0 0
    %462 = vmatprep.subr.bf16.mxu0 0
    %463 = vmatpush1.bf16.msra.mxu0 0
    %464 = vmatprep.subr.bf16.mxu0 0
    %465 = vmatpush1.bf16.msra.mxu0 0
    %466 = vmatprep.subr.bf16.mxu0 0
    %467 = vmatpush1.bf16.msra.mxu0 0
    %468 = vmatprep.subr.bf16.mxu0 0
    %469 = vmatpush1.bf16.msra.mxu0 0
    %470 = vmatprep.subr.bf16.mxu0 0
    %471 = vmatpush1.bf16.msra.mxu0 0
    %472 = vmatprep.subr.bf16.mxu0 0
    %473 = vmatpush1.bf16.msra.mxu0 0
    %474 = vmatprep.subr.bf16.mxu0 0
    %475 = vmatpush1.bf16.msra.mxu0 0
    %476 = vmatprep.subr.bf16.mxu0 0
    %477 = vmatpush1.bf16.msra.mxu0 0
    %478 = vmatprep.mubr.bf16.mxu0 0
    %479 = vmatmul.mubr.bf16.gmra.mrb[0].mxu0 %v444
    %v480 = vpop.f32.mrb[0].mxu0
    %v481 = vadd.f32 0.0, %v480
    %v482 = vpop.f32.mrb[0].mxu0
    %v483 = vpop.f32.mrb[0].mxu0
    %v484 = vpop.f32.mrb[0].mxu0
    %485 = vdwg.mxu0
    %vm486 = vcmask 254976
    %v487 = vsel %vm486, %v481, 0.0
    %488 = vadd.xlane.f32.xlu0 %v487
    %v489 = vpop.xlane.xlu0 %488
    %v490 = vrot.slane %v489, 4
    %v491 = vadd.f32 %v489, %v490
    %v492 = vrot.slane %v491, 2
    %v493 = vadd.f32 %v491, %v492
    %v494 = vrot.slane %v493, 1
    %v495 = vadd.f32 %v493, %v494
    %s496 = vtos %v495
    %v497 = vstv %s496
    %v498 = vld [vmem:[%s3] sm:$0x1]
    %v499 = vmul.f32 %v497, 0.5
    %v500 = vadd.f32 %v498, %v499
    %v502 = vlaneseq
    %v503 = vshrl.u32 %v502, 7
    %v504 = vsub.s32 0, %v503
    %v505 = vrot.slane %v500, %v504
    %507 = vst [vmem:[#allocation2] sm:$0xff] %v505
    // Predicated region
    $region18: #{tpu_custom_call.1} parent=1 // pred_check
      _
    $region19: #{tpu_custom_call.1} parent=1 // pred_check_branch
      %509 = sbr.rel (0) target = $region21
    $region20: #{tpu_custom_call.1} parent=1 // pred_region
      %s511 = ssub.s32 128, 128
      %512 = vsyncadd [#allocation3], %s511
      %s514 = sshll.u32 [#allocation2], 4
      %s515 = int_to_ptr.vmem [resolvable:$true] %s514
      %517 = dma.vmem_to_hbm [thread:$0]  %s515, 128, %s4, [#allocation3]
    $region21: #{tpu_custom_call.1} parent=1 // pred_fallthru
      _
    // Predicated region
    $region22: #{tpu_custom_call.1} parent=1 // pred_check
      _
    $region23: #{tpu_custom_call.1} parent=1 // pred_check_branch
      %519 = sbr.rel (0) target = $region25
    $region24: #{tpu_custom_call.1} parent=1 // pred_region
      %520 = dma.done [#allocation3], 128
    $region25: #{tpu_custom_call.1} parent=1 // pred_fallthru
      _
    %521 = vsyncpa [#allocation3], 1

</llo_original>
